<compile_context>
chip_gen: v7x
topology: tpu7x:2x2x1
jax: 0.10.0
libtpu: 0.0.40
codegen_flags: <defaults>
</compile_context>

<pallas_src>
import functools

import jax
import jax.numpy as jnp
from jax import lax
from jax.experimental import pallas as pl
from jax.experimental.pallas import tpu as pltpu


def _round_up(x, m):
    return ((x + m - 1) // m) * m


# ----------------------------------------------------------------------------
# Fused kernel:  y = LayerNorm( x @ W^T + b )    (LN over last dim, eps=1e-5)
#   x_ref:   (TM, F)  f32   (cast to compute_dtype in-kernel if bf16 matmul)
#   w_ref:   (F,  D)  compute_dtype   (already transposed: x @ w == x @ W^T)
#   vec_ref: (3,  D)  f32   rows = [linear bias, LN gamma, LN beta]
#   o_ref:   (TM, D)  out_dtype
# ----------------------------------------------------------------------------
def _fused_embed_ln_kernel(x_ref, w_ref, vec_ref, o_ref, *, compute_dtype):
    x = x_ref[...]
    if x.dtype != jnp.dtype(compute_dtype):
        x = x.astype(compute_dtype)          # tiny (TM, F) cast, no HBM cost

    # MXU matmul with f32 accumulation; bias broadcast from the packed vector.
    h = jnp.dot(x, w_ref[...], preferred_element_type=jnp.float32)
    h = h + vec_ref[0:1, :]                  # nn.Linear bias

    # LayerNorm epilogue in f32 (VPU/EUP friendly on all generations).
    mean = jnp.mean(h, axis=-1, keepdims=True)
    centered = h - mean
    var = jnp.mean(centered * centered, axis=-1, keepdims=True)
    inv = lax.rsqrt(var + 1e-5)
    o_ref[...] = (centered * inv * vec_ref[1:2, :]
                  + vec_ref[2:3, :]).astype(o_ref.dtype)


def fused_embed_layernorm(x2d, w_t, ln_vec, *, tm=4096,
                          compute_dtype=jnp.float32, out_dtype=jnp.float32):
    """y = LayerNorm(x2d @ w_t + bias) * gamma + beta, tiled over rows of x2d.

    ln_vec is the packed (3, D) f32 array [bias; gamma; beta].
    """
    M, F = x2d.shape
    D = w_t.shape[1]

    # ---- Row-tile sizing -----------------------------------------------
    tm = max(8, _round_up(int(tm), 8))       # sublane multiple
    tm = min(tm, _round_up(M, 8))            # never (much) larger than M
    if M > 8:
        # v7x: keep >= 2 grid steps so the "parallel" axis can shard across
        # both TensorCores (v5e/v6e single-TC: harmless).
        tm = min(tm, max(8, _round_up(-(-M // 2), 8)))

    # ---- VMEM budget ------------------------------------------------------
    # Double-buffered x/out tiles + resident weight + packed vectors.
    # Per-generation ceiling: keep tiles under ~40 MiB so the same tm fits
    # v7x (64 MiB physical VMEM per TC); v5e/v6e have 128 MiB and would allow
    # larger tiles, but there is no benefit at these arithmetic intensities.
    def _vmem_usage(t):
        return (2 * t * F * x2d.dtype.itemsize            # x tiles
                + 2 * t * D * jnp.dtype(out_dtype).itemsize  # out tiles
                + F * D * jnp.dtype(compute_dtype).itemsize  # resident weight
                + 3 * D * 4)                               # bias/gamma/beta

    while tm > 8 and _vmem_usage(tm) > (40 << 20):
        tm = max(8, _round_up(tm // 2, 8))

    vmem_bytes = int(min(max(_vmem_usage(tm) + (2 << 20), 4 << 20), 48 << 20))

    grid = (pl.cdiv(M, tm),)

    # One-time tiny cast of the weight only (x stays f32 in HBM).
    w_t = w_t.astype(compute_dtype)
    ln_vec = ln_vec.astype(jnp.float32)

    kernel = functools.partial(_fused_embed_ln_kernel,
                               compute_dtype=compute_dtype)

    out = pl.pallas_call(
        kernel,
        out_shape=jax.ShapeDtypeStruct((M, D), out_dtype),
        grid=grid,
        in_specs=[
            pl.BlockSpec((tm, F), lambda i: (i, 0)),   # x tile marches over M
            pl.BlockSpec((F, D), lambda i: (0, 0)),    # weight resident
            pl.BlockSpec((3, D), lambda i: (0, 0)),    # bias/gamma/beta packed
        ],
        out_specs=pl.BlockSpec((tm, D), lambda i: (i, 0)),
        compiler_params=pltpu.CompilerParams(
            dimension_semantics=("parallel",),         # shard M across TCs
            vmem_limit_bytes=vmem_bytes,
        ),
    )(x2d, w_t, ln_vec)

    return out


# ----------------------------------------------------------------------------
# Encoder forward
# ----------------------------------------------------------------------------
def encoder_forward(src, params, n, *, tm=4096,
                    compute_dtype=jnp.float32, out_dtype=jnp.float32):
    B, L, F = src.shape
    x = src.reshape(B * L, F).astype(jnp.float32)  # row-major reshape: no copy

    # src = self.dropout(self.embed(src)) : Dropout is identity at inference.
    # for i in range(n): src = self.layers[i](src)
    # TODO(synk): ConformerEncoderLayer / get_clones are not defined in the
    # provided source, so the n encoder layers are identity here; because of
    # that, embed-Linear + final LayerNorm are fused into ONE Pallas kernel
    # (exact for the given spec).
    del n

    out = fused_embed_layernorm(
        x,
        params["embed_w_t"],
        params["ln_vec"],
        tm=tm,
        compute_dtype=compute_dtype,
        out_dtype=out_dtype,
    )
    return out.reshape(B, L, -1)


def init_params(key, features_count, d_model):
    k_w, k_b = jax.random.split(key, 2)
    bound = 1.0 / jnp.sqrt(jnp.float32(features_count))
    # nn.Linear(features_count, d_model): weight (d_model, features_count)
    w = jax.random.uniform(
        k_w, (d_model, features_count), jnp.float32, minval=-bound, maxval=bound
    )
    b = jax.random.uniform(
        k_b, (d_model,), jnp.float32, minval=-bound, maxval=bound
    )
    gamma = jnp.ones((d_model,), jnp.float32)    # nn.LayerNorm weight
    beta = jnp.zeros((d_model,), jnp.float32)    # nn.LayerNorm bias
    return {
        "embed_w_t": w.T,                        # (F, D) so x @ w == x @ W^T
        "ln_vec": jnp.stack([b, gamma, beta]),   # (3, D) packed residents
    }


def _reference(src, params):
    B, L, F = src.shape
    w_t = params["embed_w_t"]
    vec = params["ln_vec"]
    h = src.reshape(B * L, F) @ w_t + vec[0]
    mu = h.mean(axis=-1, keepdims=True)
    var = ((h - mu) ** 2).mean(axis=-1, keepdims=True)
    y = (h - mu) / jnp.sqrt(var + 1e-5) * vec[1] + vec[2]
    return y.reshape(B, L, -1)


if __name__ == "__main__":
    # Small shapes consistent with the module's forward:
    #   batch=2, length=8, features_count=16, d_model=128 (lane-dense), n=2
    B, L, F, D, N_LAYERS = 2, 8, 16, 128, 2

    key = jax.random.PRNGKey(0)
    k_x, k_p, k_x2 = jax.random.split(key, 3)
    src = jax.random.normal(k_x, (B, L, F), jnp.float32)
    params = init_params(k_p, F, D)

    ref = _reference(src, params)

    # f32 path; default tm clamps to 8 rows here -> 2-step parallel grid.
    out_f32 = encoder_forward(src, params, N_LAYERS)
    out_f32 = jax.block_until_ready(out_f32)
    assert out_f32.shape == (B, L, D)
    assert jnp.allclose(out_f32, ref, atol=1e-5, rtol=1e-5)

    # Ragged M (B*L = 15 not a multiple of tm=8): exercises the masked last
    # tile that replaced the host-side pad + out[:M] slice.
    src_r = jax.random.normal(k_x2, (3, 5, F), jnp.float32)
    ref_r = _reference(src_r, params)
    out_r = jax.block_until_ready(
        encoder_forward(src_r, params, N_LAYERS, tm=8))
    assert out_r.shape == (3, 5, D)
    assert jnp.allclose(out_r, ref_r, atol=1e-5, rtol=1e-5)

    # bf16 matmul operands + bf16 output (f32 accumulate, f32 LN epilogue).
    out_bf16 = encoder_forward(src, params, N_LAYERS,
                               compute_dtype=jnp.bfloat16,
                               out_dtype=jnp.bfloat16)
    out_bf16 = jax.block_until_ready(out_bf16)
    assert out_bf16.shape == (B, L, D)
    assert out_bf16.dtype == jnp.bfloat16
    assert jnp.allclose(out_bf16.astype(jnp.float32), ref, atol=1e-1, rtol=1e-1)

    print("KERNEL_OK")
</pallas_src>

<mosaic_0001>
module attributes {stable_mosaic.version = 11 : i64} {
  func.func @_fused_embed_ln_kernel(%arg0: i32, %arg1: memref<8x16xf32, #tpu.memory_space<vmem>>, %arg2: memref<16x128xf32, #tpu.memory_space<vmem>>, %arg3: memref<3x128xf32, #tpu.memory_space<vmem>>, %arg4: memref<8x128xf32, #tpu.memory_space<vmem>>) attributes {dimension_semantics = [#tpu.dimension_semantics<parallel>], iteration_bounds = array<i64: 2>, scalar_prefetch = 0 : i64, scratch_operands = 0 : i64, tpu.core_type = #tpu.core_type<tc>, window_params = [{transform_indices = @transform_0, window_bounds = array<i64: 8, 16>}, {pipeline_mode = #tpu.pipeline_mode<synchronous>, transform_indices = @transform_1, window_bounds = array<i64: 16, 128>}, {pipeline_mode = #tpu.pipeline_mode<synchronous>, transform_indices = @transform_2, window_bounds = array<i64: 3, 128>}, {transform_indices = @transform_3, window_bounds = array<i64: 8, 128>}]} {
    %c0 = arith.constant 0 : index
    %c0_0 = arith.constant 0 : index
    %0 = vector.load %arg1[%c0, %c0_0] : memref<8x16xf32, #tpu.memory_space<vmem>>, vector<8x16xf32>
    %c0_1 = arith.constant 0 : index
    %c0_2 = arith.constant 0 : index
    %1 = vector.load %arg2[%c0_1, %c0_2] : memref<16x128xf32, #tpu.memory_space<vmem>>, vector<16x128xf32>
    %cst = arith.constant dense<0.000000e+00> : vector<8x128xf32>
    %2 = tpu.matmul %0, %1, %cst {dimension_numbers = #tpu.dot_dimension_numbers<[1], [0], [0], [1], [0, 0, 1, 1], [], []>} : vector<8x16xf32>, vector<16x128xf32>, vector<8x128xf32> -> vector<8x128xf32>
    %c0_3 = arith.constant 0 : index
    %c0_4 = arith.constant 0 : index
    %3 = vector.load %arg3[%c0_3, %c0_4] : memref<3x128xf32, #tpu.memory_space<vmem>>, vector<1x128xf32>
    %4 = vector.broadcast %3 : vector<1x128xf32> to vector<8x128xf32>
    %5 = arith.addf %2, %4 : vector<8x128xf32>
    %cst_5 = arith.constant dense<0.000000e+00> : vector<8xf32>
    %6 = vector.multi_reduction <add>, %5, %cst_5 [1] : vector<8x128xf32> to vector<8xf32>
    %7 = vector.shape_cast %6 : vector<8xf32> to vector<8x1xf32>
    %cst_6 = arith.constant 1.280000e+02 : f32
    %8 = vector.broadcast %cst_6 : f32 to vector<8x1xf32>
    %9 = arith.divf %7, %8 : vector<8x1xf32>
    %10 = vector.broadcast %9 : vector<8x1xf32> to vector<8x128xf32>
    %11 = arith.subf %5, %10 : vector<8x128xf32>
    %12 = arith.mulf %11, %11 : vector<8x128xf32>
    %cst_7 = arith.constant dense<0.000000e+00> : vector<8xf32>
    %13 = vector.multi_reduction <add>, %12, %cst_7 [1] : vector<8x128xf32> to vector<8xf32>
    %14 = vector.shape_cast %13 : vector<8xf32> to vector<8x1xf32>
    %cst_8 = arith.constant 1.280000e+02 : f32
    %15 = vector.broadcast %cst_8 : f32 to vector<8x1xf32>
    %16 = arith.divf %14, %15 : vector<8x1xf32>
    %cst_9 = arith.constant 9.99999974E-6 : f32
    %17 = vector.broadcast %cst_9 : f32 to vector<8x1xf32>
    %18 = arith.addf %16, %17 : vector<8x1xf32>
    %19 = math.rsqrt %18 : vector<8x1xf32>
    %20 = vector.broadcast %19 : vector<8x1xf32> to vector<8x128xf32>
    %21 = arith.mulf %11, %20 : vector<8x128xf32>
    %c1 = arith.constant 1 : index
    %c0_10 = arith.constant 0 : index
    %22 = vector.load %arg3[%c1, %c0_10] : memref<3x128xf32, #tpu.memory_space<vmem>>, vector<1x128xf32>
    %23 = vector.broadcast %22 : vector<1x128xf32> to vector<8x128xf32>
    %24 = arith.mulf %21, %23 : vector<8x128xf32>
    %c2 = arith.constant 2 : index
    %c0_11 = arith.constant 0 : index
    %25 = vector.load %arg3[%c2, %c0_11] : memref<3x128xf32, #tpu.memory_space<vmem>>, vector<1x128xf32>
    %26 = vector.broadcast %25 : vector<1x128xf32> to vector<8x128xf32>
    %27 = arith.addf %24, %26 : vector<8x128xf32>
    %c0_12 = arith.constant 0 : index
    %c0_13 = arith.constant 0 : index
    %28 = vector.load %arg4[%c0_12, %c0_13] : memref<8x128xf32, #tpu.memory_space<vmem>>, vector<8x128xf32>
    tpu.vector_store %arg4[%c0_12, %c0_13], %27 {strides = array<i32>} : memref<8x128xf32, #tpu.memory_space<vmem>>, vector<8x128xf32>,
    return
  }
  func.func @transform_0(%arg0: i32) -> (i32, i32) {
    %c0_i32 = arith.constant 0 : i32
    %c0_i32_0 = arith.constant 0 : i32
    return %arg0, %c0_i32 : i32, i32
  }
  func.func @transform_1(%arg0: i32) -> (i32, i32) {
    %c0_i32 = arith.constant 0 : i32
    %c0_i32_0 = arith.constant 0 : i32
    %c0_i32_1 = arith.constant 0 : i32
    return %c0_i32, %c0_i32_0 : i32, i32
  }
  func.func @transform_2(%arg0: i32) -> (i32, i32) {
    %c0_i32 = arith.constant 0 : i32
    %c0_i32_0 = arith.constant 0 : i32
    %c0_i32_1 = arith.constant 0 : i32
    return %c0_i32, %c0_i32_0 : i32, i32
  }
  func.func @transform_3(%arg0: i32) -> (i32, i32) {
    %c0_i32 = arith.constant 0 : i32
    %c0_i32_0 = arith.constant 0 : i32
    return %arg0, %c0_i32 : i32, i32
  }
}

</mosaic_0001>

<llo_original>
// kernel: tpu_custom_call.1
$region0: #{tpu_custom_call.1}
  #allocation0 [shape = 'u32[]', space=smem, size = 0x4, offset = 0x4, fixed_abs, tag = 'smem constant byte address 0x4 - core index']
  #allocation1 [shape = 'u32[144,128]{1,0:T(1,128)}', space=vmem, size = 0x12000, scoped, tag = 'internal scratch']
  %s0 = inlined_call_operand.hbm [shape: f32[16,16], index: 0, kind: input, shape index: {}]
  %s1 = inlined_call_operand.hbm [shape: f32[16,128], index: 1, kind: input, shape index: {}]
  %s2 = inlined_call_operand.vmem [shape: f32[3,128], index: 2, kind: input, shape index: {}]
  %s3 = inlined_call_operand.hbm [shape: f32[16,128], index: 3, kind: output, shape index: {}]
  %s4 = sld [smem:[#allocation0]]
  $region53: #{tpu_custom_call.1} parent=0
    _
  %s6 = ssub.s32 1, %s4
  %s7 = scalar_select 0, %s6, %s4
  $region1: #{tpu_custom_call.1} parent=0
    #allocation2 [shape = 'u8[8192]{0}', space=vmem, size = 0x2000, scoped, tag = 'input window, operand 0']
    #allocation3 [shape = 's32[2]{0}', space=sflag, size = 0x8, scoped, tag = 'scoped memory for tpu_custom_call.1']
    #allocation4 [shape = 's32[2]{0}', space=sflag, size = 0x8, scoped, tag = 'scoped memory for tpu_custom_call.1']
    #allocation5 [shape = 'u8[8192]{0}', space=vmem, size = 0x2000, scoped, tag = 'input window, operand 1, single buffered']
    #allocation6 [shape = 's32[1]{0}', space=sflag, size = 0x4, scoped, tag = 'scoped memory for tpu_custom_call.1']
    #allocation7 [shape = 'u8[8192]{0}', space=vmem, size = 0x2000, scoped, tag = 'output window, operand 0']
    %8 = vsyncpa [#allocation3], 0
    %s9 = scalar_lea.sflag [#allocation3], 1
    %10 = vsyncpa %s9, 0
    %11 = vsyncpa [#allocation6], 0
    %12 = vsyncpa [#allocation4], 0
    %s13 = scalar_lea.sflag [#allocation4], 1
    %14 = vsyncpa %s13, 0
    loop: start=0, step=1, limit=4
    $region2: #{tpu_custom_call.1} parent=1 // loop_pre_header
      _
    $region3: #{tpu_custom_call.1} parent=1 // loop_header
      %s16 = sphi 0, %s20
      %p17 = scmp.ge.s32.totalorder %s16, 4
      %s26 = sphi 0, %s28
      %s29 = sphi 0, %s26
      %s30 = sphi 0, %s29
      %s46 = sphi 0, %s30
      %s50 = sphi 0, %s50
      %s52 = sphi 0, %s50
      %s53 = sphi 0, %s52
      %s67 = sphi 0, %s53
      %s71 = sphi 0, %s71
      %s73 = sphi 0, %s71
      %s74 = sphi 0, %s73
      %s88 = sphi 0, %s74
      %s94 = sphi 0, %s96
      %s97 = sphi 0, %s94
      %s98 = sphi 0, %s97
      %s114 = sphi 0, %s98
    $region4: #{tpu_custom_call.1} parent=1 // loop_header_branch
      %19 = sbr.rel (%p17) target = $region8
    $region5: #{tpu_custom_call.1} parent=1 // loop_body
      %s21 = ssub.s32 %s16, 1
      %s22 = ssub.s32 %s16, 2
      %s23 = sadd.s32 %s16, 1
      %s24 = ssub.s32 %s16, %s23
      %p25 = scmp.eq.s32.totalorder %s24, 0
      %s27 = sadd.s32 %s26, 1
      %s28 = scalar_select %p25, %s26, %s27
      %p31 = pneg %p25
      %p32 = scmp.eq.s32.totalorder %s16, 1
      %p33 = por %p31, %p32
      %p34 = scmp.ne.s32.totalorder %s26, %s29
      %p35 = scmp.eq.s32.totalorder %s16, 0
      %p36 = por %p34, %p35
      %p37 = scmp.ne.s32.totalorder %s26, %s29
      %p38 = scmp.eq.s32.totalorder %s21, 1
      %p39 = por %p37, %p38
      %p40 = scmp.ne.s32.totalorder %s29, %s30
      %p41 = scmp.eq.s32.totalorder %s21, 0
      %p42 = por %p40, %p41
      %p43 = scmp.ne.s32.totalorder %s29, %s30
      %p44 = scmp.eq.s32.totalorder %s22, 1
      %p45 = por %p43, %p44
      %p47 = scmp.ne.s32.totalorder %s30, %s46
      %p48 = scmp.eq.s32.totalorder %s22, 0
      %p49 = por %p47, %p48
      %s51 = sadd.s32 %s50, 1
      %p54 = scmp.eq.s32.totalorder %s16, 1
      %p55 = scmp.ne.s32.totalorder %s50, %s52
      %p56 = scmp.eq.s32.totalorder %s16, 0
      %p57 = por %p55, %p56
      %p58 = scmp.ne.s32.totalorder %s50, %s52
      %p59 = scmp.eq.s32.totalorder %s21, 1
      %p60 = por %p58, %p59
      %p61 = scmp.ne.s32.totalorder %s52, %s53
      %p62 = scmp.eq.s32.totalorder %s21, 0
      %p63 = por %p61, %p62
      %p64 = scmp.ne.s32.totalorder %s52, %s53
      %p65 = scmp.eq.s32.totalorder %s22, 1
      %p66 = por %p64, %p65
      %p68 = scmp.ne.s32.totalorder %s53, %s67
      %p69 = scmp.eq.s32.totalorder %s22, 0
      %p70 = por %p68, %p69
      %s72 = sadd.s32 %s71, 1
      %p75 = scmp.eq.s32.totalorder %s16, 1
      %p76 = scmp.ne.s32.totalorder %s71, %s73
      %p77 = scmp.eq.s32.totalorder %s16, 0
      %p78 = por %p76, %p77
      %p79 = scmp.ne.s32.totalorder %s71, %s73
      %p80 = scmp.eq.s32.totalorder %s21, 1
      %p81 = por %p79, %p80
      %p82 = scmp.ne.s32.totalorder %s73, %s74
      %p83 = scmp.eq.s32.totalorder %s21, 0
      %p84 = por %p82, %p83
      %p85 = scmp.ne.s32.totalorder %s73, %s74
      %p86 = scmp.eq.s32.totalorder %s22, 1
      %p87 = por %p85, %p86
      %p89 = scmp.ne.s32.totalorder %s74, %s88
      %p90 = scmp.eq.s32.totalorder %s22, 0
      %p91 = por %p89, %p90
      %s92 = ssub.s32 %s16, %s23
      %p93 = scmp.eq.s32.totalorder %s92, 0
      %s95 = sadd.s32 %s94, 1
      %s96 = scalar_select %p93, %s94, %s95
      %p99 = pneg %p93
      %p100 = scmp.eq.s32.totalorder %s16, 1
      %p101 = por %p99, %p100
      %p102 = scmp.ne.s32.totalorder %s94, %s97
      %p103 = scmp.eq.s32.totalorder %s16, 0
      %p104 = por %p102, %p103
      %p105 = scmp.ne.s32.totalorder %s94, %s97
      %p106 = scmp.eq.s32.totalorder %s21, 1
      %p107 = por %p105, %p106
      %p108 = scmp.ne.s32.totalorder %s97, %s98
      %p109 = scmp.eq.s32.totalorder %s21, 0
      %p110 = por %p108, %p109
      %p111 = scmp.ne.s32.totalorder %s97, %s98
      %p112 = scmp.eq.s32.totalorder %s22, 1
      %p113 = por %p111, %p112
      %p115 = scmp.ne.s32.totalorder %s98, %s114
      %p116 = scmp.eq.s32.totalorder %s22, 0
      %p117 = por %p115, %p116
      %p118 = scmp.le.s32.totalorder 1, %s16
      %p119 = scmp.lt.s32.totalorder %s16, 3
      %p120 = pnand %p118, %p119
      %p121 = pneg %p120
      // Predicated region
      $region9: #{tpu_custom_call.1} parent=5 // pred_check
        _
      $region10: #{tpu_custom_call.1} parent=5 // pred_check_branch
        %123 = sbr.rel (%p120) target = $region12
      $region11: #{tpu_custom_call.1} parent=5 // pred_region
        %s124 = ssub.s32 %s16, 1
        // Predicated region
        $region13: #{tpu_custom_call.1} parent=11 // pred_check
          %p125 = pneg %p63
        $region14: #{tpu_custom_call.1} parent=11 // pred_check_branch
          %127 = sbr.rel (%p125) target = $region16
        $region15: #{tpu_custom_call.1} parent=11 // pred_region
          %s129 = ssub.s32 256, 256
          %130 = vsyncadd [#allocation6], %s129
          %s131 = sshll.u32 [#allocation5], 4
          %s132 = int_to_ptr.vmem [resolvable:$true] %s131
          %137 = dma.hbm_to_vmem [thread:$0]  %s1, 256, %s132, [#allocation6], 128, 128, 8
        $region16: #{tpu_custom_call.1} parent=11 // pred_fallthru
          _
        // Predicated region
        $region17: #{tpu_custom_call.1} parent=11 // pred_check
          %p138 = pneg %p84
        $region18: #{tpu_custom_call.1} parent=11 // pred_check_branch
          %140 = sbr.rel (%p138) target = $region20
        $region19: #{tpu_custom_call.1} parent=11 // pred_region
          _
        $region20: #{tpu_custom_call.1} parent=11 // pred_fallthru
          _
      $region12: #{tpu_custom_call.1} parent=5 // pred_fallthru
        _
      %p141 = scmp.lt.s32.totalorder %s16, 2
      // Predicated region
      $region21: #{tpu_custom_call.1} parent=5 // pred_check
        %p142 = pneg %p141
      $region22: #{tpu_custom_call.1} parent=5 // pred_check_branch
        %144 = sbr.rel (%p142) target = $region24
      $region23: #{tpu_custom_call.1} parent=5 // pred_region
        // Predicated region
        $region25: #{tpu_custom_call.1} parent=23 // pred_check
          %p145 = pneg %p36
        $region26: #{tpu_custom_call.1} parent=23 // pred_check_branch
          %147 = sbr.rel (%p145) target = $region28
        $region27: #{tpu_custom_call.1} parent=23 // pred_region
          %s148 = sand.u32 %s26, 1
          %s149 = scalar_lea.sflag [#allocation3], %s148
          %s150 = sand.u32 %s26, 1
          %s151 = smul.addr %s150, 8
          %s152 = scalar_lea.vmem [#allocation2], %s151
          %s154 = ssub.s32 128, 128
          %155 = vsyncadd %s149, %s154
          %s156 = smul.addr %s16, 128
          %s157 = scalar_lea.hbm %s0, %s156
          %s159 = sshll.u32 %s152, 4
          %s160 = int_to_ptr.vmem [resolvable:$true] %s159
          %162 = dma.hbm_to_vmem [thread:$0]  %s157, 128, %s160, %s149
        $region28: #{tpu_custom_call.1} parent=23 // pred_fallthru
          _
      $region24: #{tpu_custom_call.1} parent=5 // pred_fallthru
        _
      %p163 = scmp.le.s32.totalorder 1, %s16
      %p164 = scmp.lt.s32.totalorder %s16, 3
      %p165 = pnand %p163, %p164
      %p166 = pneg %p165
      // Predicated region
      $region29: #{tpu_custom_call.1} parent=5 // pred_check
        _
      $region30: #{tpu_custom_call.1} parent=5 // pred_check_branch
        %168 = sbr.rel (%p165) target = $region32
      $region31: #{tpu_custom_call.1} parent=5 // pred_region
        %s169 = ssub.s32 %s16, 1
        %s170 = sand.u32 %s29, 1
        %s171 = scalar_lea.sflag [#allocation3], %s170
        %s172 = sand.u32 %s29, 1
        %s173 = smul.addr %s172, 8
        %s174 = scalar_lea.vmem [#allocation2], %s173
        // Predicated region
        $region33: #{tpu_custom_call.1} parent=31 // pred_check
          %p175 = pneg %p42
        $region34: #{tpu_custom_call.1} parent=31 // pred_check_branch
          %177 = sbr.rel (%p175) target = $region36
        $region35: #{tpu_custom_call.1} parent=31 // pred_region
          %178 = dma.done %s171, 128
        $region36: #{tpu_custom_call.1} parent=31 // pred_fallthru
          _
        // Predicated region
        $region37: #{tpu_custom_call.1} parent=31 // pred_check
          %p179 = pneg %p63
        $region38: #{tpu_custom_call.1} parent=31 // pred_check_branch
          %181 = sbr.rel (%p179) target = $region40
        $region39: #{tpu_custom_call.1} parent=31 // pred_region
          %182 = dma.done [#allocation6], 256
        $region40: #{tpu_custom_call.1} parent=31 // pred_fallthru
          _
        %s183 = sand.u32 %s29, 1
        %s184 = scalar_lea.sflag [#allocation3], %s183
        %s185 = sand.u32 %s29, 1
        %s186 = smul.addr %s185, 8
        %s187 = scalar_lea.vmem [#allocation2], %s186
        %p188 = pneg %p42
        %p189 = pneg %p39
        %p190 = pneg %p63
        %p191 = pneg %p60
        %p192 = pneg %p84
        %p193 = pneg %p81
        %p194 = pneg %p110
        %p195 = pneg %p107
        %s196 = sand.u32 %s97, 1
        %s197 = scalar_lea.sflag [#allocation4], %s196
        %s198 = sand.u32 %s97, 1
        %s199 = smul.addr %s198, 8
        %s200 = scalar_lea.vmem [#allocation7], %s199
        %v201 = vld [vmem:[%s174] sm:$0xff]
        %v202 = vld [vmem:[#allocation5] sm:$0xff]
        %v203 = vld [vmem:[#allocation5 + $0x8] sm:$0xff]
        %v204 = vld [vmem:[%s2] sm:$0x1]
        %v205 = vlaneseq
        %v206 = vshrl.u32 %v205, 7
        %v207 = vsub.s32 0, %v206
        %v208 = vrot.slane %v204, %v207
        %vm209 = vcmask 130048
        %v211 = vsel %vm209, %v201, 0
        %213 = vmatprep.subr.mxu0 0.0
        %214 = vmatpush1.msra.mxu0 %v202
        %215 = vmatprep.subr.mxu0 0.0
        %216 = vmatpush1.msra.mxu0 %v203
        %217 = vmatprep.subr.mxu0 0.0
        %218 = vmatpush1.msra.mxu0 0.0
        %219 = vmatprep.subr.mxu0 0.0
        %220 = vmatpush1.msra.mxu0 0.0
        %221 = vmatprep.subr.mxu0 0.0
        %222 = vmatpush1.msra.mxu0 0.0
        %223 = vmatprep.subr.mxu0 0.0
        %224 = vmatpush1.msra.mxu0 0.0
        %225 = vmatprep.subr.mxu0 0.0
        %226 = vmatpush1.msra.mxu0 0.0
        %227 = vmatprep.subr.mxu0 0.0
        %228 = vmatpush1.msra.mxu0 0.0
        %229 = vmatprep.subr.mxu0 0.0
        %230 = vmatpush1.msra.mxu0 0.0
        %231 = vmatprep.subr.mxu0 0.0
        %232 = vmatpush1.msra.mxu0 0.0
        %233 = vmatprep.subr.mxu0 0.0
        %234 = vmatpush1.msra.mxu0 0.0
        %235 = vmatprep.subr.mxu0 0.0
        %236 = vmatpush1.msra.mxu0 0.0
        %237 = vmatprep.subr.mxu0 0.0
        %238 = vmatpush1.msra.mxu0 0.0
        %239 = vmatprep.subr.mxu0 0.0
        %240 = vmatpush1.msra.mxu0 0.0
        %241 = vmatprep.subr.mxu0 0.0
        %242 = vmatpush1.msra.mxu0 0.0
        %243 = vmatprep.subr.mxu0 0.0
        %244 = vmatpush1.msra.mxu0 0.0
        %245 = vmatprep.subr.mxu0 0.0
        %246 = vmatpush1.msra.mxu0 0.0
        %247 = vmatprep.subr.mxu0 0.0
        %248 = vmatpush1.msra.mxu0 0.0
        %249 = vmatprep.subr.mxu0 0.0
        %250 = vmatpush1.msra.mxu0 0.0
        %251 = vmatprep.subr.mxu0 0.0
        %252 = vmatpush1.msra.mxu0 0.0
        %253 = vmatprep.subr.mxu0 0.0
        %254 = vmatpush1.msra.mxu0 0.0
        %255 = vmatprep.subr.mxu0 0.0
        %256 = vmatpush1.msra.mxu0 0.0
        %257 = vmatprep.subr.mxu0 0.0
        %258 = vmatpush1.msra.mxu0 0.0
        %259 = vmatprep.subr.mxu0 0.0
        %260 = vmatpush1.msra.mxu0 0.0
        %261 = vmatprep.subr.mxu0 0.0
        %262 = vmatpush1.msra.mxu0 0.0
        %263 = vmatprep.subr.mxu0 0.0
        %264 = vmatpush1.msra.mxu0 0.0
        %265 = vmatprep.subr.mxu0 0.0
        %266 = vmatpush1.msra.mxu0 0.0
        %267 = vmatprep.subr.mxu0 0.0
        %268 = vmatpush1.msra.mxu0 0.0
        %269 = vmatprep.subr.mxu0 0.0
        %270 = vmatpush1.msra.mxu0 0.0
        %271 = vmatprep.subr.mxu0 0.0
        %272 = vmatpush1.msra.mxu0 0.0
        %273 = vmatprep.subr.mxu0 0.0
        %274 = vmatpush1.msra.mxu0 0.0
        %275 = vmatprep.subr.mxu0 0.0
        %276 = vmatpush1.msra.mxu0 0.0
        %277 = vmatprep.mubr.f32.mxu0 0.0
        %278 = vmatmul.mubr.f32.gmra.mrb[0].mxu0 %v211
        %v279 = vpop.f32.mrb[0].mxu0
        %v280 = vadd.f32 %v208, %v279
        %v281 = vpop.f32.mrb[0].mxu0
        %282 = vdwg.mxu0
        %283 = vadd.xlane.f32.xlu0 %v280
        %v284 = vpop.xlane.xlu0 %283
        %v285 = vrcp.pop 128.0
        %v286 = vmul.f32 %v284, %v285
        %v287 = vsub.f32 %v280, %v286
        %v288 = vmul.f32 %v287, %v287
        %289 = vadd.xlane.f32.xlu0 %v288
        %v290 = vpop.xlane.xlu0 %289
        %v291 = vmul.f32 %v290, %v285
        %v292 = vadd.f32 %v291, 1e-05
        %v293 = vrsqrt.pop %v292
        %v294 = vmul.f32 %v287, %v293
        %v295 = vld [vmem:[%s2 + $0x1] sm:$0x1]
        %v296 = vlaneseq
        %v297 = vshrl.u32 %v296, 7
        %v298 = vsub.s32 0, %v297
        %v299 = vrot.slane %v295, %v298
        %v300 = vmul.f32 %v294, %v299
        %v301 = vld [vmem:[%s2 + $0x2] sm:$0x1]
        %v302 = vlaneseq
        %v303 = vshrl.u32 %v302, 7
        %v304 = vsub.s32 0, %v303
        %v305 = vrot.slane %v301, %v304
        %v306 = vadd.f32 %v300, %v305
        %307 = vst [vmem:[%s200] sm:$0xff] %v306
        %s308 = sand.u32 %s97, 1
        %s309 = scalar_lea.sflag [#allocation4], %s308
        %s310 = sand.u32 %s97, 1
        %s311 = smul.addr %s310, 8
        %s312 = scalar_lea.vmem [#allocation7], %s311
        // Predicated region
        $region41: #{tpu_custom_call.1} parent=31 // pred_check
          %p313 = pneg %p107
        $region42: #{tpu_custom_call.1} parent=31 // pred_check_branch
          %315 = sbr.rel (%p313) target = $region44
        $region43: #{tpu_custom_call.1} parent=31 // pred_region
          %s317 = ssub.s32 128, 128
          %318 = vsyncadd %s309, %s317
          %s319 = smul.addr %s21, 128
          %s320 = scalar_lea.hbm %s3, %s319
          %s322 = sshll.u32 %s312, 4
          %s323 = int_to_ptr.vmem [resolvable:$true] %s322
          %325 = dma.vmem_to_hbm [thread:$0]  %s323, 128, %s320, %s309
        $region44: #{tpu_custom_call.1} parent=31 // pred_fallthru
          _
      $region32: #{tpu_custom_call.1} parent=5 // pred_fallthru
        _
      %p326 = scmp.le.s32.totalorder 2, %s16
      // Predicated region
      $region45: #{tpu_custom_call.1} parent=5 // pred_check
        %p327 = pneg %p326
      $region46: #{tpu_custom_call.1} parent=5 // pred_check_branch
        %329 = sbr.rel (%p327) target = $region48
      $region47: #{tpu_custom_call.1} parent=5 // pred_region
        %s330 = ssub.s32 %s16, 2
        // Predicated region
        $region49: #{tpu_custom_call.1} parent=47 // pred_check
          %p331 = pneg %p113
        $region50: #{tpu_custom_call.1} parent=47 // pred_check_branch
          %333 = sbr.rel (%p331) target = $region52
        $region51: #{tpu_custom_call.1} parent=47 // pred_region
          %s334 = sand.u32 %s98, 1
          %s335 = scalar_lea.sflag [#allocation4], %s334
          %s336 = sand.u32 %s98, 1
          %s337 = smul.addr %s336, 8
          %s338 = scalar_lea.vmem [#allocation7], %s337
          %339 = dma.done %s335, 128
        $region52: #{tpu_custom_call.1} parent=47 // pred_fallthru
          _
      $region48: #{tpu_custom_call.1} parent=5 // pred_fallthru
        _
    $region6: #{tpu_custom_call.1} parent=1 // loop_footer
      %s20 = sadd.s32 1, %s16
    $region7: #{tpu_custom_call.1} parent=1 // loop_footer_branch
      %15 = sbr.rel target = $region3
    $region8: #{tpu_custom_call.1} parent=1 // loop_exit
      _
    %340 = vsyncpa [#allocation3], 1
    %s341 = scalar_lea.sflag [#allocation3], 1
    %342 = vsyncpa %s341, 1
    %343 = vsyncpa [#allocation6], 1
    %344 = vsyncpa [#allocation4], 1
    %s345 = scalar_lea.sflag [#allocation4], 1
    %346 = vsyncpa %s345, 1

</llo_original>
